<compile_context>
chip_gen: v7x
topology: tpu7x:2x2x1
jax: 0.10.0
libtpu: 0.0.40
codegen_flags: <defaults>
</compile_context>

<pallas_src>
import functools

import jax
import jax.numpy as jnp
from jax.experimental import pallas as pl
from jax.experimental.pallas import tpu as pltpu


# ---------------------------------------------------------------------------
# Fused single-pass kernel: pool -> gates -> apply, one HBM read of x.
# ---------------------------------------------------------------------------
def _fused_kernel(x_ref, w1_ref, b1_ref, wh_ref, bh_ref, ww_ref, bw_ref,
                  out_ref, *, h, w):
    x = x_ref[0]                                                   # (C, H, W)

    # Coordinate pooling with f32 accumulation (no full f32 copy of x).
    x_h = jnp.sum(x, axis=2, dtype=jnp.float32) * (1.0 / w)        # (C, H)
    x_w = jnp.sum(x, axis=1, dtype=jnp.float32) * (1.0 / h)        # (C, W)

    # conv1 + folded BN + h_swish.  Two matmuls sharing the same weights
    # (mathematically identical to the PyTorch concat/conv/split, without the
    # sublane concat+slice relayout).
    y_h = jnp.dot(w1_ref[...], x_h, preferred_element_type=jnp.float32) + b1_ref[...]
    y_w = jnp.dot(w1_ref[...], x_w, preferred_element_type=jnp.float32) + b1_ref[...]
    y_h = y_h * jnp.clip(y_h + 3.0, 0.0, 6.0) * (1.0 / 6.0)
    y_w = y_w * jnp.clip(y_w + 3.0, 0.0, 6.0) * (1.0 / 6.0)

    a_h = jax.nn.sigmoid(
        jnp.dot(wh_ref[...], y_h, preferred_element_type=jnp.float32) + bh_ref[...])  # (C, H)
    a_w = jax.nn.sigmoid(
        jnp.dot(ww_ref[...], y_w, preferred_element_type=jnp.float32) + bw_ref[...])  # (C, W)

    a_h = a_h.astype(x.dtype)
    a_w = a_w.astype(x.dtype)
    out_ref[0] = (x * a_h[:, :, None] * a_w[:, None, :]).astype(out_ref.dtype)


# ---------------------------------------------------------------------------
# Two-pass fallback, phase 1: pooling + gates (H tiled, "arbitrary").
# ---------------------------------------------------------------------------
def _pool_gates_kernel(x_ref, w1_ref, b1_ref, wh_ref, bh_ref, ww_ref, bw_ref,
                       ah_ref, aw_ref, xw_acc, *, h, w):
    j = pl.program_id(1)
    nj = pl.num_programs(1)
    x = x_ref[0]                                                   # (C, th, W)

    @pl.when(j == 0)
    def _():
        xw_acc[...] = jnp.zeros_like(xw_acc)

    # pool_h rows of this H-tile are complete (W is not tiled), so the a_h
    # gate columns for this tile can be produced immediately (tiny matmuls).
    xh_t = jnp.sum(x, axis=2, dtype=jnp.float32) * (1.0 / w)       # (C, th)
    y_h = jnp.dot(w1_ref[...], xh_t, preferred_element_type=jnp.float32) + b1_ref[...]
    y_h = y_h * jnp.clip(y_h + 3.0, 0.0, 6.0) * (1.0 / 6.0)
    a_h = jax.nn.sigmoid(
        jnp.dot(wh_ref[...], y_h, preferred_element_type=jnp.float32) + bh_ref[...])
    ah_ref[0, 0] = a_h.astype(ah_ref.dtype)                        # (C, th)

    # pool_w: partial sum over H, accumulated across the H-tiles.
    xw_acc[...] += jnp.sum(x, axis=1, dtype=jnp.float32)           # (C, W)

    @pl.when(j == nj - 1)
    def _():
        x_w = xw_acc[...] * (1.0 / h)
        y_w = jnp.dot(w1_ref[...], x_w, preferred_element_type=jnp.float32) + b1_ref[...]
        y_w = y_w * jnp.clip(y_w + 3.0, 0.0, 6.0) * (1.0 / 6.0)
        a_w = jax.nn.sigmoid(
            jnp.dot(ww_ref[...], y_w, preferred_element_type=jnp.float32) + bw_ref[...])
        aw_ref[0] = a_w.astype(aw_ref.dtype)                       # (C, W)


# ---------------------------------------------------------------------------
# Two-pass fallback, phase 2: broadcast multiply (fully parallel).
# ---------------------------------------------------------------------------
def _apply_kernel(x_ref, ah_ref, aw_ref, out_ref):
    x = x_ref[0]                                                   # (C, th, W)
    a_h = ah_ref[0, 0].astype(x.dtype)                             # (C, th)
    a_w = aw_ref[0].astype(x.dtype)                                # (C, W)
    out_ref[0] = (x * a_h[:, :, None] * a_w[:, None, :]).astype(out_ref.dtype)


# ---------------------------------------------------------------------------
# Wrapper helpers.
# ---------------------------------------------------------------------------
def _vmem_budget():
    """Usable VMEM budget per generation (leave headroom for Mosaic scratch)."""
    cap = 64 << 20  # conservative default (v7x physical VMEM per TC)
    try:
        info = pltpu.get_tpu_info()
        cap = int(getattr(info, "vmem_capacity_bytes", cap)) or cap
    except Exception:
        pass
    return int(max(32 << 20, min(cap - (16 << 20), 112 << 20)))


def _pick_h_tile(h, c, w, itemsize, target_bytes):
    """Largest divisor th of h with th % 8 == 0 (second-minor block dim rule)
    whose (C, th, W) block fits target_bytes.  Falls back to the smallest
    legal tile, then to full H if H has no multiple-of-8 divisor."""
    if c * h * w * itemsize <= target_bytes:
        return h
    cands = [t for t in range(8, h, 8) if h % t == 0]
    fitting = [t for t in cands if c * t * w * itemsize <= target_bytes]
    if fitting:
        return max(fitting)
    if cands:
        return min(cands)
    # TODO(synk): H with no multiple-of-8 divisor -> full-H blocks (may be big).
    return h


# ---------------------------------------------------------------------------
# Public entry point (PyTorch-compatible NCHW, no layout transposes).
# ---------------------------------------------------------------------------
def coord_att(x, params, *, eps=1e-5, force_two_pass=False, h_tile_bytes=None):
    """CoordAtt forward.  x: (N, C, H, W) -> (N, C, H, W)."""
    n, c, h, w = x.shape

    w1, b1 = params["conv1_w"], params["conv1_b"]                  # (mip, C), (mip,)
    gamma, beta = params["bn_gamma"], params["bn_beta"]
    rmean, rvar = params["bn_mean"], params["bn_var"]
    wh, bh = params["convh_w"], params["convh_b"]                  # (oup, mip), (oup,)
    ww, bw = params["convw_w"], params["convw_b"]

    mip = w1.shape[0]
    oup = wh.shape[0]
    assert oup == c, "CoordAtt output gates must match input channels"

    # Fold eval-mode BatchNorm into conv1 (exact).
    bn_scale = gamma / jnp.sqrt(rvar + eps)
    w1_f = (w1 * bn_scale[:, None]).astype(jnp.float32)            # (mip, C)
    b1_f = (b1 * bn_scale + (beta - rmean * bn_scale)).astype(jnp.float32)

    b1r = b1_f.reshape(mip, 1)
    whf = wh.astype(jnp.float32)
    bhr = bh.astype(jnp.float32).reshape(oup, 1)
    wwf = ww.astype(jnp.float32)
    bwr = bw.astype(jnp.float32).reshape(oup, 1)

    itemsize = jnp.dtype(x.dtype).itemsize
    img_bytes = c * h * w * itemsize
    budget = _vmem_budget()
    slack = 4 << 20
    weight_bytes = 2 * 4 * (mip * c + mip + 2 * (oup * mip + oup))  # dbl-buffered f32

    weight_specs = [
        pl.BlockSpec((mip, c), lambda *_: (0, 0)),
        pl.BlockSpec((mip, 1), lambda *_: (0, 0)),
        pl.BlockSpec((oup, mip), lambda *_: (0, 0)),
        pl.BlockSpec((oup, 1), lambda *_: (0, 0)),
        pl.BlockSpec((oup, mip), lambda *_: (0, 0)),
        pl.BlockSpec((oup, 1), lambda *_: (0, 0)),
    ]
    weight_args = (w1_f, b1r, whf, bhr, wwf, bwr)

    # ---- Fused single-pass path: x read from HBM exactly once -----------
    fused_vmem = 4 * img_bytes + weight_bytes + slack   # dbl-buffered in+out
    if (not force_two_pass) and fused_vmem <= budget:
        return pl.pallas_call(
            functools.partial(_fused_kernel, h=h, w=w),
            out_shape=jax.ShapeDtypeStruct((n, c, h, w), x.dtype),
            grid_spec=pltpu.PrefetchScalarGridSpec(
                num_scalar_prefetch=0,
                grid=(n,),
                in_specs=[pl.BlockSpec((1, c, h, w), lambda i: (i, 0, 0, 0))]
                         + weight_specs,
                out_specs=pl.BlockSpec((1, c, h, w), lambda i: (i, 0, 0, 0)),
            ),
            compiler_params=pltpu.CompilerParams(
                dimension_semantics=("parallel",),
                vmem_limit_bytes=int(min(max(fused_vmem, 16 << 20), budget))),
        )(x, *weight_args)

    # ---- Two-pass H-tiled fallback (large images) ------------------------
    if h_tile_bytes is None:
        h_tile_bytes = int(min(16 << 20, max(2 << 20, (budget - slack) // 6)))
    th = _pick_h_tile(h, c, w, itemsize, h_tile_bytes)
    n_ht = h // th
    blk = c * th * w * itemsize
    gate_dtype = jnp.float32   # gates are tiny; keep full precision in HBM

    # Phase 1: pooling + gates.  a_h is stored blocked as (N, n_ht, C, th) so
    # every block's trailing dims equal full array dims (no relayout, no
    # dynamic lane slicing); only the (C, W) pool accumulator lives in scratch.
    vmem1 = int(min(max(2 * blk + 2 * (c * th + c * w) * 4 + c * w * 4
                        + weight_bytes + slack, 16 << 20), budget))
    a_h, a_w = pl.pallas_call(
        functools.partial(_pool_gates_kernel, h=h, w=w),
        out_shape=(jax.ShapeDtypeStruct((n, n_ht, c, th), gate_dtype),
                   jax.ShapeDtypeStruct((n, c, w), gate_dtype)),
        grid_spec=pltpu.PrefetchScalarGridSpec(
            num_scalar_prefetch=0,
            grid=(n, n_ht),
            in_specs=[pl.BlockSpec((1, c, th, w), lambda i, j: (i, 0, j, 0))]
                     + weight_specs,
            out_specs=(pl.BlockSpec((1, 1, c, th), lambda i, j: (i, j, 0, 0)),
                       pl.BlockSpec((1, c, w), lambda i, j: (i, 0, 0))),
            scratch_shapes=[pltpu.VMEM((c, w), jnp.float32)],
        ),
        compiler_params=pltpu.CompilerParams(
            dimension_semantics=("parallel", "arbitrary"),
            vmem_limit_bytes=vmem1),
    )(x, *weight_args)

    # Phase 2: broadcast multiply (lane dim = W, both grid axes parallel).
    vmem2 = int(min(max(4 * blk + 2 * (c * th + c * w) * 4 + slack, 16 << 20),
                    budget))
    out = pl.pallas_call(
        _apply_kernel,
        out_shape=jax.ShapeDtypeStruct((n, c, h, w), x.dtype),
        grid_spec=pltpu.PrefetchScalarGridSpec(
            num_scalar_prefetch=0,
            grid=(n, n_ht),
            in_specs=[pl.BlockSpec((1, c, th, w), lambda i, j: (i, 0, j, 0)),
                      pl.BlockSpec((1, 1, c, th), lambda i, j: (i, j, 0, 0)),
                      pl.BlockSpec((1, c, w), lambda i, j: (i, 0, 0))],
            out_specs=pl.BlockSpec((1, c, th, w), lambda i, j: (i, 0, j, 0)),
        ),
        compiler_params=pltpu.CompilerParams(
            dimension_semantics=("parallel", "parallel"),
            vmem_limit_bytes=vmem2),
    )(x, a_h, a_w)
    return out


# ---------------------------------------------------------------------------
# Pure-JAX reference mirroring the PyTorch forward (eval-mode BN), NCHW.
# ---------------------------------------------------------------------------
def ref_coord_att(x, params, eps=1e-5):
    n, c, h, w = x.shape
    w1, b1 = params["conv1_w"], params["conv1_b"]
    gamma, beta = params["bn_gamma"], params["bn_beta"]
    rmean, rvar = params["bn_mean"], params["bn_var"]
    wh, bh = params["convh_w"], params["convh_b"]
    ww, bw = params["convw_w"], params["convw_b"]

    x_h = jnp.mean(x, axis=3, keepdims=True)                        # (n,c,h,1)
    x_w = jnp.mean(x, axis=2, keepdims=True).transpose(0, 1, 3, 2)  # (n,c,w,1)
    y = jnp.concatenate([x_h, x_w], axis=2)                         # (n,c,h+w,1)
    y = jnp.einsum("oc,nchw->nohw", w1, y) + b1[None, :, None, None]
    y = (y - rmean[None, :, None, None]) / jnp.sqrt(rvar[None, :, None, None] + eps)
    y = y * gamma[None, :, None, None] + beta[None, :, None, None]
    y = y * jnp.clip(y + 3.0, 0.0, 6.0) / 6.0
    xh, xw = y[:, :, :h, :], y[:, :, h:, :]
    xw = xw.transpose(0, 1, 3, 2)
    a_h = jax.nn.sigmoid(jnp.einsum("om,nmhw->nohw", wh, xh) + bh[None, :, None, None])
    a_w = jax.nn.sigmoid(jnp.einsum("om,nmhw->nohw", ww, xw) + bw[None, :, None, None])
    return x * a_w * a_h


def _make_params(key, inp, oup, reduction=32):
    mip = max(8, inp // reduction)
    keys = jax.random.split(key, 10)
    return {
        "conv1_w": jax.random.normal(keys[0], (mip, inp), dtype=jnp.float32) * 0.2,
        "conv1_b": jax.random.normal(keys[1], (mip,), dtype=jnp.float32) * 0.1,
        "bn_gamma": 1.0 + 0.1 * jax.random.normal(keys[2], (mip,), dtype=jnp.float32),
        "bn_beta": 0.1 * jax.random.normal(keys[3], (mip,), dtype=jnp.float32),
        "bn_mean": 0.05 * jax.random.normal(keys[4], (mip,), dtype=jnp.float32),
        "bn_var": jnp.abs(1.0 + 0.1 * jax.random.normal(keys[5], (mip,), dtype=jnp.float32)),
        "convh_w": jax.random.normal(keys[6], (oup, mip), dtype=jnp.float32) * 0.2,
        "convh_b": jnp.zeros((oup,), dtype=jnp.float32),
        "convw_w": jax.random.normal(keys[7], (oup, mip), dtype=jnp.float32) * 0.2,
        "convw_b": 0.05 * jax.random.normal(keys[8], (oup,), dtype=jnp.float32),
    }


if __name__ == "__main__":
    key = jax.random.PRNGKey(0)
    k1, k2, k3, k4 = jax.random.split(key, 4)

    # Test 1: fused single-pass path (inp = oup = 4, reduction=32 -> mip=8).
    N, C, H, W = 2, 4, 16, 16
    x = jax.random.normal(k1, (N, C, H, W), dtype=jnp.float32)
    params = _make_params(k2, C, C)
    out = jax.block_until_ready(coord_att(x, params))
    ref = ref_coord_att(x, params)
    assert out.shape == (N, C, H, W)
    assert jnp.allclose(out, ref, rtol=1e-5, atol=1e-5), "mismatch vs reference (fused)"

    # Test 2: force the H-tiled two-pass fallback (th=8 < H=32, 4 H-tiles).
    N2, C2, H2, W2 = 1, 8, 32, 16
    x2 = jax.random.normal(k3, (N2, C2, H2, W2), dtype=jnp.float32)
    params2 = _make_params(k4, C2, C2)
    out2 = jax.block_until_ready(
        coord_att(x2, params2, force_two_pass=True,
                  h_tile_bytes=C2 * 8 * W2 * 4))
    ref2 = ref_coord_att(x2, params2)
    assert out2.shape == (N2, C2, H2, W2)
    assert jnp.allclose(out2, ref2, rtol=1e-5, atol=1e-5), "mismatch vs reference (two-pass)"

    print("KERNEL_OK")
</pallas_src>

<mosaic_0001>
module attributes {stable_mosaic.version = 11 : i64} {
  func.func @_fused_kernel(%arg0: i32, %arg1: memref<1x4x16x16xf32, #tpu.memory_space<vmem>>, %arg2: memref<8x4xf32, #tpu.memory_space<vmem>>, %arg3: memref<8x1xf32, #tpu.memory_space<vmem>>, %arg4: memref<4x8xf32, #tpu.memory_space<vmem>>, %arg5: memref<4x1xf32, #tpu.memory_space<vmem>>, %arg6: memref<4x8xf32, #tpu.memory_space<vmem>>, %arg7: memref<4x1xf32, #tpu.memory_space<vmem>>, %arg8: memref<1x4x16x16xf32, #tpu.memory_space<vmem>>) attributes {dimension_semantics = [#tpu.dimension_semantics<parallel>], iteration_bounds = array<i64: 2>, scalar_prefetch = 0 : i64, scratch_operands = 0 : i64, tpu.core_type = #tpu.core_type<tc>, window_params = [{transform_indices = @transform_0, window_bounds = array<i64: 1, 4, 16, 16>}, {pipeline_mode = #tpu.pipeline_mode<synchronous>, transform_indices = @transform_1, window_bounds = array<i64: 8, 4>}, {pipeline_mode = #tpu.pipeline_mode<synchronous>, transform_indices = @transform_2, window_bounds = array<i64: 8, 1>}, {pipeline_mode = #tpu.pipeline_mode<synchronous>, transform_indices = @transform_3, window_bounds = array<i64: 4, 8>}, {pipeline_mode = #tpu.pipeline_mode<synchronous>, transform_indices = @transform_4, window_bounds = array<i64: 4, 1>}, {pipeline_mode = #tpu.pipeline_mode<synchronous>, transform_indices = @transform_5, window_bounds = array<i64: 4, 8>}, {pipeline_mode = #tpu.pipeline_mode<synchronous>, transform_indices = @transform_6, window_bounds = array<i64: 4, 1>}, {transform_indices = @transform_7, window_bounds = array<i64: 1, 4, 16, 16>}]} {
    %c0 = arith.constant 0 : index
    %c0_0 = arith.constant 0 : index
    %c0_1 = arith.constant 0 : index
    %c0_2 = arith.constant 0 : index
    %0 = vector.load %arg1[%c0, %c0_0, %c0_1, %c0_2] : memref<1x4x16x16xf32, #tpu.memory_space<vmem>>, vector<1x4x16x16xf32>
    %1 = vector.shape_cast %0 : vector<1x4x16x16xf32> to vector<4x16x16xf32>
    %cst = arith.constant dense<0.000000e+00> : vector<4x16xf32>
    %2 = vector.multi_reduction <add>, %1, %cst [2] : vector<4x16x16xf32> to vector<4x16xf32>
    %cst_3 = arith.constant 6.250000e-02 : f32
    %3 = vector.broadcast %cst_3 : f32 to vector<4x16xf32>
    %4 = arith.mulf %2, %3 : vector<4x16xf32>
    %cst_4 = arith.constant dense<0.000000e+00> : vector<4x16xf32>
    %5 = vector.multi_reduction <add>, %1, %cst_4 [1] : vector<4x16x16xf32> to vector<4x16xf32>
    %cst_5 = arith.constant 6.250000e-02 : f32
    %6 = vector.broadcast %cst_5 : f32 to vector<4x16xf32>
    %7 = arith.mulf %5, %6 : vector<4x16xf32>
    %c0_6 = arith.constant 0 : index
    %c0_7 = arith.constant 0 : index
    %8 = vector.load %arg2[%c0_6, %c0_7] : memref<8x4xf32, #tpu.memory_space<vmem>>, vector<8x4xf32>
    %cst_8 = arith.constant dense<0.000000e+00> : vector<8x16xf32>
    %9 = tpu.matmul %8, %4, %cst_8 {dimension_numbers = #tpu.dot_dimension_numbers<[1], [0], [0], [1], [0, 0, 1, 1], [], []>} : vector<8x4xf32>, vector<4x16xf32>, vector<8x16xf32> -> vector<8x16xf32>
    %c0_9 = arith.constant 0 : index
    %c0_10 = arith.constant 0 : index
    %10 = vector.load %arg3[%c0_9, %c0_10] : memref<8x1xf32, #tpu.memory_space<vmem>>, vector<8x1xf32>
    %11 = vector.broadcast %10 : vector<8x1xf32> to vector<8x16xf32>
    %12 = arith.addf %9, %11 : vector<8x16xf32>
    %c0_11 = arith.constant 0 : index
    %c0_12 = arith.constant 0 : index
    %13 = vector.load %arg2[%c0_11, %c0_12] : memref<8x4xf32, #tpu.memory_space<vmem>>, vector<8x4xf32>
    %cst_13 = arith.constant dense<0.000000e+00> : vector<8x16xf32>
    %14 = tpu.matmul %13, %7, %cst_13 {dimension_numbers = #tpu.dot_dimension_numbers<[1], [0], [0], [1], [0, 0, 1, 1], [], []>} : vector<8x4xf32>, vector<4x16xf32>, vector<8x16xf32> -> vector<8x16xf32>
    %c0_14 = arith.constant 0 : index
    %c0_15 = arith.constant 0 : index
    %15 = vector.load %arg3[%c0_14, %c0_15] : memref<8x1xf32, #tpu.memory_space<vmem>>, vector<8x1xf32>
    %16 = vector.broadcast %15 : vector<8x1xf32> to vector<8x16xf32>
    %17 = arith.addf %14, %16 : vector<8x16xf32>
    %cst_16 = arith.constant 3.000000e+00 : f32
    %18 = vector.broadcast %cst_16 : f32 to vector<8x16xf32>
    %19 = arith.addf %12, %18 : vector<8x16xf32>
    %cst_17 = arith.constant 0.000000e+00 : f32
    %cst_18 = arith.constant 6.000000e+00 : f32
    %20 = vector.broadcast %cst_17 : f32 to vector<8x16xf32>
    %21 = arith.maximumf %20, %19 : vector<8x16xf32>
    %22 = vector.broadcast %cst_18 : f32 to vector<8x16xf32>
    %23 = arith.minimumf %22, %21 : vector<8x16xf32>
    %24 = arith.mulf %12, %23 : vector<8x16xf32>
    %cst_19 = arith.constant 0.166666672 : f32
    %25 = vector.broadcast %cst_19 : f32 to vector<8x16xf32>
    %26 = arith.mulf %24, %25 : vector<8x16xf32>
    %cst_20 = arith.constant 3.000000e+00 : f32
    %27 = vector.broadcast %cst_20 : f32 to vector<8x16xf32>
    %28 = arith.addf %17, %27 : vector<8x16xf32>
    %cst_21 = arith.constant 0.000000e+00 : f32
    %cst_22 = arith.constant 6.000000e+00 : f32
    %29 = vector.broadcast %cst_21 : f32 to vector<8x16xf32>
    %30 = arith.maximumf %29, %28 : vector<8x16xf32>
    %31 = vector.broadcast %cst_22 : f32 to vector<8x16xf32>
    %32 = arith.minimumf %31, %30 : vector<8x16xf32>
    %33 = arith.mulf %17, %32 : vector<8x16xf32>
    %cst_23 = arith.constant 0.166666672 : f32
    %34 = vector.broadcast %cst_23 : f32 to vector<8x16xf32>
    %35 = arith.mulf %33, %34 : vector<8x16xf32>
    %c0_24 = arith.constant 0 : index
    %c0_25 = arith.constant 0 : index
    %36 = vector.load %arg4[%c0_24, %c0_25] : memref<4x8xf32, #tpu.memory_space<vmem>>, vector<4x8xf32>
    %cst_26 = arith.constant dense<0.000000e+00> : vector<4x16xf32>
    %37 = tpu.matmul %36, %26, %cst_26 {dimension_numbers = #tpu.dot_dimension_numbers<[1], [0], [0], [1], [0, 0, 1, 1], [], []>} : vector<4x8xf32>, vector<8x16xf32>, vector<4x16xf32> -> vector<4x16xf32>
    %c0_27 = arith.constant 0 : index
    %c0_28 = arith.constant 0 : index
    %38 = vector.load %arg5[%c0_27, %c0_28] : memref<4x1xf32, #tpu.memory_space<vmem>>, vector<4x1xf32>
    %39 = vector.broadcast %38 : vector<4x1xf32> to vector<4x16xf32>
    %40 = arith.addf %37, %39 : vector<4x16xf32>
    %41 = arith.negf %40 : vector<4x16xf32>
    %42 = math.exp %41 : vector<4x16xf32>
    %cst_29 = arith.constant 1.000000e+00 : f32
    %43 = vector.broadcast %cst_29 : f32 to vector<4x16xf32>
    %44 = arith.addf %43, %42 : vector<4x16xf32>
    %45 = arith.divf %43, %44 : vector<4x16xf32>
    %c0_30 = arith.constant 0 : index
    %c0_31 = arith.constant 0 : index
    %46 = vector.load %arg6[%c0_30, %c0_31] : memref<4x8xf32, #tpu.memory_space<vmem>>, vector<4x8xf32>
    %cst_32 = arith.constant dense<0.000000e+00> : vector<4x16xf32>
    %47 = tpu.matmul %46, %35, %cst_32 {dimension_numbers = #tpu.dot_dimension_numbers<[1], [0], [0], [1], [0, 0, 1, 1], [], []>} : vector<4x8xf32>, vector<8x16xf32>, vector<4x16xf32> -> vector<4x16xf32>
    %c0_33 = arith.constant 0 : index
    %c0_34 = arith.constant 0 : index
    %48 = vector.load %arg7[%c0_33, %c0_34] : memref<4x1xf32, #tpu.memory_space<vmem>>, vector<4x1xf32>
    %49 = vector.broadcast %48 : vector<4x1xf32> to vector<4x16xf32>
    %50 = arith.addf %47, %49 : vector<4x16xf32>
    %51 = arith.negf %50 : vector<4x16xf32>
    %52 = math.exp %51 : vector<4x16xf32>
    %cst_35 = arith.constant 1.000000e+00 : f32
    %53 = vector.broadcast %cst_35 : f32 to vector<4x16xf32>
    %54 = arith.addf %53, %52 : vector<4x16xf32>
    %55 = arith.divf %53, %54 : vector<4x16xf32>
    %56 = vector.shape_cast %45 : vector<4x16xf32> to vector<4x16x1xf32>
    %57 = vector.broadcast %56 : vector<4x16x1xf32> to vector<4x16x16xf32>
    %58 = arith.mulf %1, %57 : vector<4x16x16xf32>
    %59 = vector.shape_cast %55 : vector<4x16xf32> to vector<4x1x16xf32>
    %60 = vector.broadcast %59 : vector<4x1x16xf32> to vector<4x16x16xf32>
    %61 = arith.mulf %58, %60 : vector<4x16x16xf32>
    %c0_36 = arith.constant 0 : index
    %c0_37 = arith.constant 0 : index
    %c0_38 = arith.constant 0 : index
    %c0_39 = arith.constant 0 : index
    %62 = vector.load %arg8[%c0_36, %c0_37, %c0_38, %c0_39] : memref<1x4x16x16xf32, #tpu.memory_space<vmem>>, vector<1x4x16x16xf32>
    %63 = vector.shape_cast %62 : vector<1x4x16x16xf32> to vector<4x16x16xf32>
    %64 = vector.shape_cast %61 : vector<4x16x16xf32> to vector<1x4x16x16xf32>
    tpu.vector_store %arg8[%c0_36, %c0_37, %c0_38, %c0_39], %64 {strides = array<i32>} : memref<1x4x16x16xf32, #tpu.memory_space<vmem>>, vector<1x4x16x16xf32>,
    return
  }
  func.func @transform_0(%arg0: i32) -> (i32, i32, i32, i32) {
    %c0_i32 = arith.constant 0 : i32
    %c0_i32_0 = arith.constant 0 : i32
    %c0_i32_1 = arith.constant 0 : i32
    %c0_i32_2 = arith.constant 0 : i32
    return %arg0, %c0_i32, %c0_i32_0, %c0_i32_1 : i32, i32, i32, i32
  }
  func.func @transform_1(%arg0: i32) -> (i32, i32) {
    %c0_i32 = arith.constant 0 : i32
    %c0_i32_0 = arith.constant 0 : i32
    %c0_i32_1 = arith.constant 0 : i32
    return %c0_i32, %c0_i32_0 : i32, i32
  }
  func.func @transform_2(%arg0: i32) -> (i32, i32) {
    %c0_i32 = arith.constant 0 : i32
    %c0_i32_0 = arith.constant 0 : i32
    %c0_i32_1 = arith.constant 0 : i32
    return %c0_i32, %c0_i32_0 : i32, i32
  }
  func.func @transform_3(%arg0: i32) -> (i32, i32) {
    %c0_i32 = arith.constant 0 : i32
    %c0_i32_0 = arith.constant 0 : i32
    %c0_i32_1 = arith.constant 0 : i32
    return %c0_i32, %c0_i32_0 : i32, i32
  }
  func.func @transform_4(%arg0: i32) -> (i32, i32) {
    %c0_i32 = arith.constant 0 : i32
    %c0_i32_0 = arith.constant 0 : i32
    %c0_i32_1 = arith.constant 0 : i32
    return %c0_i32, %c0_i32_0 : i32, i32
  }
  func.func @transform_5(%arg0: i32) -> (i32, i32) {
    %c0_i32 = arith.constant 0 : i32
    %c0_i32_0 = arith.constant 0 : i32
    %c0_i32_1 = arith.constant 0 : i32
    return %c0_i32, %c0_i32_0 : i32, i32
  }
  func.func @transform_6(%arg0: i32) -> (i32, i32) {
    %c0_i32 = arith.constant 0 : i32
    %c0_i32_0 = arith.constant 0 : i32
    %c0_i32_1 = arith.constant 0 : i32
    return %c0_i32, %c0_i32_0 : i32, i32
  }
  func.func @transform_7(%arg0: i32) -> (i32, i32, i32, i32) {
    %c0_i32 = arith.constant 0 : i32
    %c0_i32_0 = arith.constant 0 : i32
    %c0_i32_1 = arith.constant 0 : i32
    %c0_i32_2 = arith.constant 0 : i32
    return %arg0, %c0_i32, %c0_i32_0, %c0_i32_1 : i32, i32, i32, i32
  }
}

</mosaic_0001>

<llo_original>
// kernel: tpu_custom_call.1
$region0: #{tpu_custom_call.1}
  #allocation0 [shape = 'u32[]', space=smem, size = 0x4, offset = 0x4, fixed_abs, tag = 'smem constant byte address 0x4 - core index']
  #allocation1 [shape = 'u32[144,128]{1,0:T(1,128)}', space=vmem, size = 0x12000, scoped, tag = 'internal scratch']
  %s0 = inlined_call_operand.hbm [shape: f32[2,4,16,16], index: 0, kind: input, shape index: {}]
  %s1 = inlined_call_operand.vmem [shape: f32[8,4], index: 1, kind: input, shape index: {}]
  %s2 = inlined_call_operand.vmem [shape: f32[8,1], index: 2, kind: input, shape index: {}]
  %s3 = inlined_call_operand.vmem [shape: f32[4,8], index: 3, kind: input, shape index: {}]
  %s4 = inlined_call_operand.vmem [shape: f32[4,1], index: 4, kind: input, shape index: {}]
  %s5 = inlined_call_operand.vmem [shape: f32[4,8], index: 5, kind: input, shape index: {}]
  %s6 = inlined_call_operand.vmem [shape: f32[4,1], index: 6, kind: input, shape index: {}]
  %s7 = inlined_call_operand.hbm [shape: f32[2,4,16,16], index: 7, kind: output, shape index: {}]
  %s8 = sld [smem:[#allocation0]]
  $region65: #{tpu_custom_call.1} parent=0
    _
  %s10 = ssub.s32 1, %s8
  %s11 = scalar_select 0, %s10, %s8
  $region1: #{tpu_custom_call.1} parent=0
    #allocation2 [shape = 'u8[65536]{0}', space=vmem, size = 0x10000, scoped, tag = 'input window, operand 0']
    #allocation3 [shape = 's32[2]{0}', space=sflag, size = 0x8, scoped, tag = 'scoped memory for tpu_custom_call.1']
    #allocation4 [shape = 's32[2]{0}', space=sflag, size = 0x8, scoped, tag = 'scoped memory for tpu_custom_call.1']
    #allocation5 [shape = 'u8[65536]{0}', space=vmem, size = 0x10000, scoped, tag = 'output window, operand 0']
    %12 = vsyncpa [#allocation3], 0
    %s13 = scalar_lea.sflag [#allocation3], 1
    %14 = vsyncpa %s13, 0
    %15 = vsyncpa [#allocation4], 0
    %s16 = scalar_lea.sflag [#allocation4], 1
    %17 = vsyncpa %s16, 0
    loop: start=0, step=1, limit=4
    $region2: #{tpu_custom_call.1} parent=1 // loop_pre_header
      _
    $region3: #{tpu_custom_call.1} parent=1 // loop_header
      %s19 = sphi 0, %s23
      %p20 = scmp.ge.s32.totalorder %s19, 4
      %s29 = sphi 0, %s31
      %s32 = sphi 0, %s29
      %s33 = sphi 0, %s32
      %s49 = sphi 0, %s33
      %s53 = sphi 0, %s53
      %s55 = sphi 0, %s53
      %s56 = sphi 0, %s55
      %s70 = sphi 0, %s56
      %s74 = sphi 0, %s74
      %s76 = sphi 0, %s74
      %s77 = sphi 0, %s76
      %s91 = sphi 0, %s77
      %s95 = sphi 0, %s95
      %s97 = sphi 0, %s95
      %s98 = sphi 0, %s97
      %s112 = sphi 0, %s98
      %s116 = sphi 0, %s116
      %s118 = sphi 0, %s116
      %s119 = sphi 0, %s118
      %s133 = sphi 0, %s119
      %s137 = sphi 0, %s137
      %s139 = sphi 0, %s137
      %s140 = sphi 0, %s139
      %s154 = sphi 0, %s140
      %s158 = sphi 0, %s158
      %s160 = sphi 0, %s158
      %s161 = sphi 0, %s160
      %s175 = sphi 0, %s161
      %s181 = sphi 0, %s183
      %s184 = sphi 0, %s181
      %s185 = sphi 0, %s184
      %s201 = sphi 0, %s185
    $region4: #{tpu_custom_call.1} parent=1 // loop_header_branch
      %22 = sbr.rel (%p20) target = $region8
    $region5: #{tpu_custom_call.1} parent=1 // loop_body
      %s24 = ssub.s32 %s19, 1
      %s25 = ssub.s32 %s19, 2
      %s26 = sadd.s32 %s19, 1
      %s27 = ssub.s32 %s19, %s26
      %p28 = scmp.eq.s32.totalorder %s27, 0
      %s30 = sadd.s32 %s29, 1
      %s31 = scalar_select %p28, %s29, %s30
      %p34 = pneg %p28
      %p35 = scmp.eq.s32.totalorder %s19, 1
      %p36 = por %p34, %p35
      %p37 = scmp.ne.s32.totalorder %s29, %s32
      %p38 = scmp.eq.s32.totalorder %s19, 0
      %p39 = por %p37, %p38
      %p40 = scmp.ne.s32.totalorder %s29, %s32
      %p41 = scmp.eq.s32.totalorder %s24, 1
      %p42 = por %p40, %p41
      %p43 = scmp.ne.s32.totalorder %s32, %s33
      %p44 = scmp.eq.s32.totalorder %s24, 0
      %p45 = por %p43, %p44
      %p46 = scmp.ne.s32.totalorder %s32, %s33
      %p47 = scmp.eq.s32.totalorder %s25, 1
      %p48 = por %p46, %p47
      %p50 = scmp.ne.s32.totalorder %s33, %s49
      %p51 = scmp.eq.s32.totalorder %s25, 0
      %p52 = por %p50, %p51
      %s54 = sadd.s32 %s53, 1
      %p57 = scmp.eq.s32.totalorder %s19, 1
      %p58 = scmp.ne.s32.totalorder %s53, %s55
      %p59 = scmp.eq.s32.totalorder %s19, 0
      %p60 = por %p58, %p59
      %p61 = scmp.ne.s32.totalorder %s53, %s55
      %p62 = scmp.eq.s32.totalorder %s24, 1
      %p63 = por %p61, %p62
      %p64 = scmp.ne.s32.totalorder %s55, %s56
      %p65 = scmp.eq.s32.totalorder %s24, 0
      %p66 = por %p64, %p65
      %p67 = scmp.ne.s32.totalorder %s55, %s56
      %p68 = scmp.eq.s32.totalorder %s25, 1
      %p69 = por %p67, %p68
      %p71 = scmp.ne.s32.totalorder %s56, %s70
      %p72 = scmp.eq.s32.totalorder %s25, 0
      %p73 = por %p71, %p72
      %s75 = sadd.s32 %s74, 1
      %p78 = scmp.eq.s32.totalorder %s19, 1
      %p79 = scmp.ne.s32.totalorder %s74, %s76
      %p80 = scmp.eq.s32.totalorder %s19, 0
      %p81 = por %p79, %p80
      %p82 = scmp.ne.s32.totalorder %s74, %s76
      %p83 = scmp.eq.s32.totalorder %s24, 1
      %p84 = por %p82, %p83
      %p85 = scmp.ne.s32.totalorder %s76, %s77
      %p86 = scmp.eq.s32.totalorder %s24, 0
      %p87 = por %p85, %p86
      %p88 = scmp.ne.s32.totalorder %s76, %s77
      %p89 = scmp.eq.s32.totalorder %s25, 1
      %p90 = por %p88, %p89
      %p92 = scmp.ne.s32.totalorder %s77, %s91
      %p93 = scmp.eq.s32.totalorder %s25, 0
      %p94 = por %p92, %p93
      %s96 = sadd.s32 %s95, 1
      %p99 = scmp.eq.s32.totalorder %s19, 1
      %p100 = scmp.ne.s32.totalorder %s95, %s97
      %p101 = scmp.eq.s32.totalorder %s19, 0
      %p102 = por %p100, %p101
      %p103 = scmp.ne.s32.totalorder %s95, %s97
      %p104 = scmp.eq.s32.totalorder %s24, 1
      %p105 = por %p103, %p104
      %p106 = scmp.ne.s32.totalorder %s97, %s98
      %p107 = scmp.eq.s32.totalorder %s24, 0
      %p108 = por %p106, %p107
      %p109 = scmp.ne.s32.totalorder %s97, %s98
      %p110 = scmp.eq.s32.totalorder %s25, 1
      %p111 = por %p109, %p110
      %p113 = scmp.ne.s32.totalorder %s98, %s112
      %p114 = scmp.eq.s32.totalorder %s25, 0
      %p115 = por %p113, %p114
      %s117 = sadd.s32 %s116, 1
      %p120 = scmp.eq.s32.totalorder %s19, 1
      %p121 = scmp.ne.s32.totalorder %s116, %s118
      %p122 = scmp.eq.s32.totalorder %s19, 0
      %p123 = por %p121, %p122
      %p124 = scmp.ne.s32.totalorder %s116, %s118
      %p125 = scmp.eq.s32.totalorder %s24, 1
      %p126 = por %p124, %p125
      %p127 = scmp.ne.s32.totalorder %s118, %s119
      %p128 = scmp.eq.s32.totalorder %s24, 0
      %p129 = por %p127, %p128
      %p130 = scmp.ne.s32.totalorder %s118, %s119
      %p131 = scmp.eq.s32.totalorder %s25, 1
      %p132 = por %p130, %p131
      %p134 = scmp.ne.s32.totalorder %s119, %s133
      %p135 = scmp.eq.s32.totalorder %s25, 0
      %p136 = por %p134, %p135
      %s138 = sadd.s32 %s137, 1
      %p141 = scmp.eq.s32.totalorder %s19, 1
      %p142 = scmp.ne.s32.totalorder %s137, %s139
      %p143 = scmp.eq.s32.totalorder %s19, 0
      %p144 = por %p142, %p143
      %p145 = scmp.ne.s32.totalorder %s137, %s139
      %p146 = scmp.eq.s32.totalorder %s24, 1
      %p147 = por %p145, %p146
      %p148 = scmp.ne.s32.totalorder %s139, %s140
      %p149 = scmp.eq.s32.totalorder %s24, 0
      %p150 = por %p148, %p149
      %p151 = scmp.ne.s32.totalorder %s139, %s140
      %p152 = scmp.eq.s32.totalorder %s25, 1
      %p153 = por %p151, %p152
      %p155 = scmp.ne.s32.totalorder %s140, %s154
      %p156 = scmp.eq.s32.totalorder %s25, 0
      %p157 = por %p155, %p156
      %s159 = sadd.s32 %s158, 1
      %p162 = scmp.eq.s32.totalorder %s19, 1
      %p163 = scmp.ne.s32.totalorder %s158, %s160
      %p164 = scmp.eq.s32.totalorder %s19, 0
      %p165 = por %p163, %p164
      %p166 = scmp.ne.s32.totalorder %s158, %s160
      %p167 = scmp.eq.s32.totalorder %s24, 1
      %p168 = por %p166, %p167
      %p169 = scmp.ne.s32.totalorder %s160, %s161
      %p170 = scmp.eq.s32.totalorder %s24, 0
      %p171 = por %p169, %p170
      %p172 = scmp.ne.s32.totalorder %s160, %s161
      %p173 = scmp.eq.s32.totalorder %s25, 1
      %p174 = por %p172, %p173
      %p176 = scmp.ne.s32.totalorder %s161, %s175
      %p177 = scmp.eq.s32.totalorder %s25, 0
      %p178 = por %p176, %p177
      %s179 = ssub.s32 %s19, %s26
      %p180 = scmp.eq.s32.totalorder %s179, 0
      %s182 = sadd.s32 %s181, 1
      %s183 = scalar_select %p180, %s181, %s182
      %p186 = pneg %p180
      %p187 = scmp.eq.s32.totalorder %s19, 1
      %p188 = por %p186, %p187
      %p189 = scmp.ne.s32.totalorder %s181, %s184
      %p190 = scmp.eq.s32.totalorder %s19, 0
      %p191 = por %p189, %p190
      %p192 = scmp.ne.s32.totalorder %s181, %s184
      %p193 = scmp.eq.s32.totalorder %s24, 1
      %p194 = por %p192, %p193
      %p195 = scmp.ne.s32.totalorder %s184, %s185
      %p196 = scmp.eq.s32.totalorder %s24, 0
      %p197 = por %p195, %p196
      %p198 = scmp.ne.s32.totalorder %s184, %s185
      %p199 = scmp.eq.s32.totalorder %s25, 1
      %p200 = por %p198, %p199
      %p202 = scmp.ne.s32.totalorder %s185, %s201
      %p203 = scmp.eq.s32.totalorder %s25, 0
      %p204 = por %p202, %p203
      %p205 = scmp.le.s32.totalorder 1, %s19
      %p206 = scmp.lt.s32.totalorder %s19, 3
      %p207 = pnand %p205, %p206
      %p208 = pneg %p207
      // Predicated region
      $region9: #{tpu_custom_call.1} parent=5 // pred_check
        _
      $region10: #{tpu_custom_call.1} parent=5 // pred_check_branch
        %210 = sbr.rel (%p207) target = $region12
      $region11: #{tpu_custom_call.1} parent=5 // pred_region
        %s211 = ssub.s32 %s19, 1
        // Predicated region
        $region13: #{tpu_custom_call.1} parent=11 // pred_check
          %p212 = pneg %p66
        $region14: #{tpu_custom_call.1} parent=11 // pred_check_branch
          %214 = sbr.rel (%p212) target = $region16
        $region15: #{tpu_custom_call.1} parent=11 // pred_region
          _
        $region16: #{tpu_custom_call.1} parent=11 // pred_fallthru
          _
        // Predicated region
        $region17: #{tpu_custom_call.1} parent=11 // pred_check
          %p215 = pneg %p87
        $region18: #{tpu_custom_call.1} parent=11 // pred_check_branch
          %217 = sbr.rel (%p215) target = $region20
        $region19: #{tpu_custom_call.1} parent=11 // pred_region
          _
        $region20: #{tpu_custom_call.1} parent=11 // pred_fallthru
          _
        // Predicated region
        $region21: #{tpu_custom_call.1} parent=11 // pred_check
          %p218 = pneg %p108
        $region22: #{tpu_custom_call.1} parent=11 // pred_check_branch
          %220 = sbr.rel (%p218) target = $region24
        $region23: #{tpu_custom_call.1} parent=11 // pred_region
          _
        $region24: #{tpu_custom_call.1} parent=11 // pred_fallthru
          _
        // Predicated region
        $region25: #{tpu_custom_call.1} parent=11 // pred_check
          %p221 = pneg %p129
        $region26: #{tpu_custom_call.1} parent=11 // pred_check_branch
          %223 = sbr.rel (%p221) target = $region28
        $region27: #{tpu_custom_call.1} parent=11 // pred_region
          _
        $region28: #{tpu_custom_call.1} parent=11 // pred_fallthru
          _
        // Predicated region
        $region29: #{tpu_custom_call.1} parent=11 // pred_check
          %p224 = pneg %p150
        $region30: #{tpu_custom_call.1} parent=11 // pred_check_branch
          %226 = sbr.rel (%p224) target = $region32
        $region31: #{tpu_custom_call.1} parent=11 // pred_region
          _
        $region32: #{tpu_custom_call.1} parent=11 // pred_fallthru
          _
        // Predicated region
        $region33: #{tpu_custom_call.1} parent=11 // pred_check
          %p227 = pneg %p171
        $region34: #{tpu_custom_call.1} parent=11 // pred_check_branch
          %229 = sbr.rel (%p227) target = $region36
        $region35: #{tpu_custom_call.1} parent=11 // pred_region
          _
        $region36: #{tpu_custom_call.1} parent=11 // pred_fallthru
          _
      $region12: #{tpu_custom_call.1} parent=5 // pred_fallthru
        _
      %p230 = scmp.lt.s32.totalorder %s19, 2
      // Predicated region
      $region37: #{tpu_custom_call.1} parent=5 // pred_check
        %p231 = pneg %p230
      $region38: #{tpu_custom_call.1} parent=5 // pred_check_branch
        %233 = sbr.rel (%p231) target = $region40
      $region39: #{tpu_custom_call.1} parent=5 // pred_region
        // Predicated region
        $region41: #{tpu_custom_call.1} parent=39 // pred_check
          %p234 = pneg %p39
        $region42: #{tpu_custom_call.1} parent=39 // pred_check_branch
          %236 = sbr.rel (%p234) target = $region44
        $region43: #{tpu_custom_call.1} parent=39 // pred_region
          %s237 = sand.u32 %s29, 1
          %s238 = scalar_lea.sflag [#allocation3], %s237
          %s239 = sand.u32 %s29, 1
          %s240 = smul.addr %s239, 64
          %s241 = scalar_lea.vmem [#allocation2], %s240
          %s243 = ssub.s32 1024, 1024
          %244 = vsyncadd %s238, %s243
          %s245 = smul.addr %s19, 8
          %s246 = smul.addr %s245, 128
          %s247 = scalar_lea.hbm %s0, %s246
          %s248 = sshll.u32 %s241, 4
          %s249 = int_to_ptr.vmem [resolvable:$true] %s248
          %254 = dma.hbm_to_vmem [thread:$0]  %s247, 1024, %s249, %s238, 128, 128, 8
        $region44: #{tpu_custom_call.1} parent=39 // pred_fallthru
          _
      $region40: #{tpu_custom_call.1} parent=5 // pred_fallthru
        _
      %p255 = scmp.le.s32.totalorder 1, %s19
      %p256 = scmp.lt.s32.totalorder %s19, 3
      %p257 = pnand %p255, %p256
      %p258 = pneg %p257
      // Predicated region
      $region45: #{tpu_custom_call.1} parent=5 // pred_check
        _
      $region46: #{tpu_custom_call.1} parent=5 // pred_check_branch
        %260 = sbr.rel (%p257) target = $region48
      $region47: #{tpu_custom_call.1} parent=5 // pred_region
        %s261 = ssub.s32 %s19, 1
        %s262 = sand.u32 %s32, 1
        %s263 = scalar_lea.sflag [#allocation3], %s262
        %s264 = sand.u32 %s32, 1
        %s265 = smul.addr %s264, 64
        %s266 = scalar_lea.vmem [#allocation2], %s265
        // Predicated region
        $region49: #{tpu_custom_call.1} parent=47 // pred_check
          %p267 = pneg %p45
        $region50: #{tpu_custom_call.1} parent=47 // pred_check_branch
          %269 = sbr.rel (%p267) target = $region52
        $region51: #{tpu_custom_call.1} parent=47 // pred_region
          %270 = dma.done %s263, 1024
        $region52: #{tpu_custom_call.1} parent=47 // pred_fallthru
          _
        %s271 = sand.u32 %s32, 1
        %s272 = scalar_lea.sflag [#allocation3], %s271
        %s273 = sand.u32 %s32, 1
        %s274 = smul.addr %s273, 64
        %s275 = scalar_lea.vmem [#allocation2], %s274
        %p276 = pneg %p45
        %p277 = pneg %p42
        %p278 = pneg %p66
        %p279 = pneg %p63
        %p280 = pneg %p87
        %p281 = pneg %p84
        %p282 = pneg %p108
        %p283 = pneg %p105
        %p284 = pneg %p129
        %p285 = pneg %p126
        %p286 = pneg %p150
        %p287 = pneg %p147
        %p288 = pneg %p171
        %p289 = pneg %p168
        %p290 = pneg %p197
        %p291 = pneg %p194
        %s292 = sand.u32 %s184, 1
        %s293 = scalar_lea.sflag [#allocation4], %s292
        %s294 = sand.u32 %s184, 1
        %s295 = smul.addr %s294, 64
        %s296 = scalar_lea.vmem [#allocation5], %s295
        %v297 = vld [vmem:[%s266] sm:$0xff]
        %v298 = vld [vmem:[%s266 + $0x8] sm:$0xff]
        %v299 = vld [vmem:[%s266 + $0x10] sm:$0xff]
        %v300 = vld [vmem:[%s266 + $0x18] sm:$0xff]
        %v301 = vld [vmem:[%s266 + $0x20] sm:$0xff]
        %v302 = vld [vmem:[%s266 + $0x28] sm:$0xff]
        %v303 = vld [vmem:[%s266 + $0x30] sm:$0xff]
        %v304 = vld [vmem:[%s266 + $0x38] sm:$0xff]
        %vm305 = vcmask 130048
        %v306 = vsel %vm305, %v297, 0.0
        %307 = vadd.xlane.f32.xlu0 %v306
        %v308 = vpop.xlane.xlu0 %307
        %v309 = vsel %vm305, %v298, 0.0
        %310 = vadd.xlane.f32.xlu0 %v309
        %v311 = vpop.xlane.xlu0 %310
        %v312 = vsel %vm305, %v299, 0.0
        %313 = vadd.xlane.f32.xlu0 %v312
        %v314 = vpop.xlane.xlu0 %313
        %v315 = vsel %vm305, %v300, 0.0
        %316 = vadd.xlane.f32.xlu0 %v315
        %v317 = vpop.xlane.xlu0 %316
        %v318 = vsel %vm305, %v301, 0.0
        %319 = vadd.xlane.f32.xlu0 %v318
        %v320 = vpop.xlane.xlu0 %319
        %v321 = vsel %vm305, %v302, 0.0
        %322 = vadd.xlane.f32.xlu0 %v321
        %v323 = vpop.xlane.xlu0 %322
        %v324 = vsel %vm305, %v303, 0.0
        %325 = vadd.xlane.f32.xlu0 %v324
        %v326 = vpop.xlane.xlu0 %325
        %v327 = vsel %vm305, %v304, 0.0
        %328 = vadd.xlane.f32.xlu0 %v327
        %v329 = vpop.xlane.xlu0 %328
        %v330 = vmul.f32 %v308, 0.0625
        %v331 = vmul.f32 %v311, 0.0625
        %v332 = vmul.f32 %v314, 0.0625
        %v333 = vmul.f32 %v317, 0.0625
        %v334 = vmul.f32 %v320, 0.0625
        %v335 = vmul.f32 %v323, 0.0625
        %v336 = vmul.f32 %v326, 0.0625
        %v337 = vmul.f32 %v329, 0.0625
        %v338 = vadd.f32 %v306, %v309
        %v339 = vrot.slane %v338, 4
        %v340 = vadd.f32 %v338, %v339
        %v341 = vrot.slane %v340, 2
        %v342 = vadd.f32 %v340, %v341
        %v343 = vrot.slane %v342, 1
        %v344 = vadd.f32 %v342, %v343
        %v345 = vadd.f32 %v312, %v315
        %v346 = vrot.slane %v345, 4
        %v347 = vadd.f32 %v345, %v346
        %v348 = vrot.slane %v347, 2
        %v349 = vadd.f32 %v347, %v348
        %v350 = vrot.slane %v349, 1
        %v351 = vadd.f32 %v349, %v350
        %v352 = vadd.f32 %v318, %v321
        %v353 = vrot.slane %v352, 4
        %v354 = vadd.f32 %v352, %v353
        %v355 = vrot.slane %v354, 2
        %v356 = vadd.f32 %v354, %v355
        %v357 = vrot.slane %v356, 1
        %v358 = vadd.f32 %v356, %v357
        %v359 = vadd.f32 %v324, %v327
        %v360 = vrot.slane %v359, 4
        %v361 = vadd.f32 %v359, %v360
        %v362 = vrot.slane %v361, 2
        %v363 = vadd.f32 %v361, %v362
        %v364 = vrot.slane %v363, 1
        %v365 = vadd.f32 %v363, %v364
        %v366 = vmul.f32 %v344, 0.0625
        %v367 = vmul.f32 %v351, 0.0625
        %v368 = vmul.f32 %v358, 0.0625
        %v369 = vmul.f32 %v365, 0.0625
        %v370 = vld [vmem:[%s1] sm:$0xff]
        %v371 = vld [vmem:[%s2] sm:$0xff]
        %373 = vset.pattern.permute.xlu0 0
        %374 = vperm.xlu0 %373, %v371
        %v375 = vpop.permute.xlu0 %374
        %v385 = vlaneseq
        %v386 = vand.u32 %v385, 127
        %v387 = vlaneseq
        %v388 = vshrl.u32 %v387, 7
        %v389 = vsub.s32 %v386, %v388
        %v390 = vrot.slane %v330, %v389
        %v391 = vadd.s32 %v386, 4294967288
        %v392 = vlaneseq
        %v393 = vshrl.u32 %v392, 7
        %v394 = vsub.s32 %v391, %v393
        %v395 = vrot.slane %v331, %v394
        %vm396 = vcmask 130112
        %v397 = vsel %vm396, %v395, %v390
        %v398 = vlaneseq
        %v399 = vshrl.u32 %v398, 7
        %v400 = vsub.s32 %v386, %v399
        %v401 = vrot.slane %v332, %v400
        %v402 = vlaneseq
        %v403 = vshrl.u32 %v402, 7
        %v404 = vsub.s32 %v391, %v403
        %v405 = vrot.slane %v333, %v404
        %v406 = vsel %vm396, %v405, %v401
        %v407 = vlaneseq
        %v408 = vshrl.u32 %v407, 7
        %v409 = vsub.s32 %v386, %v408
        %v410 = vrot.slane %v334, %v409
        %v411 = vlaneseq
        %v412 = vshrl.u32 %v411, 7
        %v413 = vsub.s32 %v391, %v412
        %v414 = vrot.slane %v335, %v413
        %v415 = vsel %vm396, %v414, %v410
        %v416 = vlaneseq
        %v417 = vshrl.u32 %v416, 7
        %v418 = vsub.s32 %v386, %v417
        %v419 = vrot.slane %v336, %v418
        %v420 = vlaneseq
        %v421 = vshrl.u32 %v420, 7
        %v422 = vsub.s32 %v391, %v421
        %v423 = vrot.slane %v337, %v422
        %v424 = vsel %vm396, %v423, %v419
        %vm425 = vcmask 1041409
        %v426 = vsel %vm425, %v406, %v397
        %vm427 = vcmask 1042434
        %v428 = vsel %vm427, %v415, %v426
        %vm429 = vcmask 1043459
        %v430 = vsel %vm429, %v424, %v428
        %vm431 = vcmask 31744
        %v433 = vsel %vm431, %v370, 0
        %vm435 = vcmask 1043456
        %v436 = vsel %vm435, %v430, 0
        %438 = vmatprep.subr.mxu0 0.0
        %439 = vmatpush1.msra.mxu0 %v436
        %440 = vmatprep.subr.mxu0 0.0
        %441 = vmatpush1.msra.mxu0 0.0
        %442 = vmatprep.subr.mxu0 0.0
        %443 = vmatpush1.msra.mxu0 0.0
        %444 = vmatprep.subr.mxu0 0.0
        %445 = vmatpush1.msra.mxu0 0.0
        %446 = vmatprep.subr.mxu0 0.0
        %447 = vmatpush1.msra.mxu0 0.0
        %448 = vmatprep.subr.mxu0 0.0
        %449 = vmatpush1.msra.mxu0 0.0
        %450 = vmatprep.subr.mxu0 0.0
        %451 = vmatpush1.msra.mxu0 0.0
        %452 = vmatprep.subr.mxu0 0.0
        %453 = vmatpush1.msra.mxu0 0.0
        %454 = vmatprep.subr.mxu0 0.0
        %455 = vmatpush1.msra.mxu0 0.0
        %456 = vmatprep.subr.mxu0 0.0
        %457 = vmatpush1.msra.mxu0 0.0
        %458 = vmatprep.subr.mxu0 0.0
        %459 = vmatpush1.msra.mxu0 0.0
        %460 = vmatprep.subr.mxu0 0.0
        %461 = vmatpush1.msra.mxu0 0.0
        %462 = vmatprep.subr.mxu0 0.0
        %463 = vmatpush1.msra.mxu0 0.0
        %464 = vmatprep.subr.mxu0 0.0
        %465 = vmatpush1.msra.mxu0 0.0
        %466 = vmatprep.subr.mxu0 0.0
        %467 = vmatpush1.msra.mxu0 0.0
        %468 = vmatprep.subr.mxu0 0.0
        %469 = vmatpush1.msra.mxu0 0.0
        %470 = vmatprep.subr.mxu0 0.0
        %471 = vmatpush1.msra.mxu0 0.0
        %472 = vmatprep.subr.mxu0 0.0
        %473 = vmatpush1.msra.mxu0 0.0
        %474 = vmatprep.subr.mxu0 0.0
        %475 = vmatpush1.msra.mxu0 0.0
        %476 = vmatprep.subr.mxu0 0.0
        %477 = vmatpush1.msra.mxu0 0.0
        %478 = vmatprep.subr.mxu0 0.0
        %479 = vmatpush1.msra.mxu0 0.0
        %480 = vmatprep.subr.mxu0 0.0
        %481 = vmatpush1.msra.mxu0 0.0
        %482 = vmatprep.subr.mxu0 0.0
        %483 = vmatpush1.msra.mxu0 0.0
        %484 = vmatprep.subr.mxu0 0.0
        %485 = vmatpush1.msra.mxu0 0.0
        %486 = vmatprep.subr.mxu0 0.0
        %487 = vmatpush1.msra.mxu0 0.0
        %488 = vmatprep.subr.mxu0 0.0
        %489 = vmatpush1.msra.mxu0 0.0
        %490 = vmatprep.subr.mxu0 0.0
        %491 = vmatpush1.msra.mxu0 0.0
        %492 = vmatprep.subr.mxu0 0.0
        %493 = vmatpush1.msra.mxu0 0.0
        %494 = vmatprep.subr.mxu0 0.0
        %495 = vmatpush1.msra.mxu0 0.0
        %496 = vmatprep.subr.mxu0 0.0
        %497 = vmatpush1.msra.mxu0 0.0
        %498 = vmatprep.subr.mxu0 0.0
        %499 = vmatpush1.msra.mxu0 0.0
        %500 = vmatprep.subr.mxu0 0.0
        %501 = vmatpush1.msra.mxu0 0.0
        %502 = vmatprep.mubr.f32.mxu0 0.0
        %503 = vmatmul.mubr.f32.gmra.mrb[0].mxu0 %v433
        %v504 = vpop.f32.mrb[0].mxu0
        %v505 = vadd.f32 %v375, %v504
        %v506 = vpop.f32.mrb[0].mxu0
        %507 = vdwg.mxu0
        %v512 = vsel %vm425, %v367, %v366
        %v513 = vsel %vm427, %v368, %v512
        %v514 = vsel %vm429, %v369, %v513
        %v515 = vsel %vm435, %v514, 0
        %517 = vmatprep.subr.mxu0 0.0
        %518 = vmatpush1.msra.mxu0 %v515
        %519 = vmatprep.subr.mxu0 0.0
        %520 = vmatpush1.msra.mxu0 0.0
        %521 = vmatprep.subr.mxu0 0.0
        %522 = vmatpush1.msra.mxu0 0.0
        %523 = vmatprep.subr.mxu0 0.0
        %524 = vmatpush1.msra.mxu0 0.0
        %525 = vmatprep.subr.mxu0 0.0
        %526 = vmatpush1.msra.mxu0 0.0
        %527 = vmatprep.subr.mxu0 0.0
        %528 = vmatpush1.msra.mxu0 0.0
        %529 = vmatprep.subr.mxu0 0.0
        %530 = vmatpush1.msra.mxu0 0.0
        %531 = vmatprep.subr.mxu0 0.0
        %532 = vmatpush1.msra.mxu0 0.0
        %533 = vmatprep.subr.mxu0 0.0
        %534 = vmatpush1.msra.mxu0 0.0
        %535 = vmatprep.subr.mxu0 0.0
        %536 = vmatpush1.msra.mxu0 0.0
        %537 = vmatprep.subr.mxu0 0.0
        %538 = vmatpush1.msra.mxu0 0.0
        %539 = vmatprep.subr.mxu0 0.0
        %540 = vmatpush1.msra.mxu0 0.0
        %541 = vmatprep.subr.mxu0 0.0
        %542 = vmatpush1.msra.mxu0 0.0
        %543 = vmatprep.subr.mxu0 0.0
        %544 = vmatpush1.msra.mxu0 0.0
        %545 = vmatprep.subr.mxu0 0.0
        %546 = vmatpush1.msra.mxu0 0.0
        %547 = vmatprep.subr.mxu0 0.0
        %548 = vmatpush1.msra.mxu0 0.0
        %549 = vmatprep.subr.mxu0 0.0
        %550 = vmatpush1.msra.mxu0 0.0
        %551 = vmatprep.subr.mxu0 0.0
        %552 = vmatpush1.msra.mxu0 0.0
        %553 = vmatprep.subr.mxu0 0.0
        %554 = vmatpush1.msra.mxu0 0.0
        %555 = vmatprep.subr.mxu0 0.0
        %556 = vmatpush1.msra.mxu0 0.0
        %557 = vmatprep.subr.mxu0 0.0
        %558 = vmatpush1.msra.mxu0 0.0
        %559 = vmatprep.subr.mxu0 0.0
        %560 = vmatpush1.msra.mxu0 0.0
        %561 = vmatprep.subr.mxu0 0.0
        %562 = vmatpush1.msra.mxu0 0.0
        %563 = vmatprep.subr.mxu0 0.0
        %564 = vmatpush1.msra.mxu0 0.0
        %565 = vmatprep.subr.mxu0 0.0
        %566 = vmatpush1.msra.mxu0 0.0
        %567 = vmatprep.subr.mxu0 0.0
        %568 = vmatpush1.msra.mxu0 0.0
        %569 = vmatprep.subr.mxu0 0.0
        %570 = vmatpush1.msra.mxu0 0.0
        %571 = vmatprep.subr.mxu0 0.0
        %572 = vmatpush1.msra.mxu0 0.0
        %573 = vmatprep.subr.mxu0 0.0
        %574 = vmatpush1.msra.mxu0 0.0
        %575 = vmatprep.subr.mxu0 0.0
        %576 = vmatpush1.msra.mxu0 0.0
        %577 = vmatprep.subr.mxu0 0.0
        %578 = vmatpush1.msra.mxu0 0.0
        %579 = vmatprep.subr.mxu0 0.0
        %580 = vmatpush1.msra.mxu0 0.0
        %581 = vmatprep.mubr.f32.mxu0 0.0
        %582 = vmatmul.mubr.f32.gmra.mrb[0].mxu0 %v433
        %v583 = vpop.f32.mrb[0].mxu0
        %v584 = vadd.f32 %v375, %v583
        %v585 = vpop.f32.mrb[0].mxu0
        %586 = vdwg.mxu0
        %v587 = vadd.f32 %v505, 3.0
        %v588 = vmax.f32 %v587, 0.0
        %v589 = vmin.f32 %v588, 6.0
        %v590 = vmul.f32 %v505, %v589
        %v591 = vmul.f32 %v590, 0.16666667
        %v592 = vadd.f32 %v584, 3.0
        %v593 = vmax.f32 %v592, 0.0
        %v594 = vmin.f32 %v593, 6.0
        %v595 = vmul.f32 %v584, %v594
        %v596 = vmul.f32 %v595, 0.16666667
        %v597 = vld [vmem:[%s3] sm:$0xf]
        %v598 = vld [vmem:[%s4] sm:$0xf]
        %600 = vset.pattern.permute.xlu0 0
        %601 = vperm.xlu0 %600, %v598
        %v602 = vpop.permute.xlu0 %601
        %vm604 = vcmask 64512
        %v606 = vsel %vm604, %v597, 0
        %608 = vmatprep.subr.mxu0 0.0
        %609 = vmatpush1.msra.mxu0 %v591
        %610 = vmatprep.subr.mxu0 0.0
        %611 = vmatpush1.msra.mxu0 0.0
        %612 = vmatprep.subr.mxu0 0.0
        %613 = vmatpush1.msra.mxu0 0.0
        %614 = vmatprep.subr.mxu0 0.0
        %615 = vmatpush1.msra.mxu0 0.0
        %616 = vmatprep.subr.mxu0 0.0
        %617 = vmatpush1.msra.mxu0 0.0
        %618 = vmatprep.subr.mxu0 0.0
        %619 = vmatpush1.msra.mxu0 0.0
        %620 = vmatprep.subr.mxu0 0.0
        %621 = vmatpush1.msra.mxu0 0.0
        %622 = vmatprep.subr.mxu0 0.0
        %623 = vmatpush1.msra.mxu0 0.0
        %624 = vmatprep.subr.mxu0 0.0
        %625 = vmatpush1.msra.mxu0 0.0
        %626 = vmatprep.subr.mxu0 0.0
        %627 = vmatpush1.msra.mxu0 0.0
        %628 = vmatprep.subr.mxu0 0.0
        %629 = vmatpush1.msra.mxu0 0.0
        %630 = vmatprep.subr.mxu0 0.0
        %631 = vmatpush1.msra.mxu0 0.0
        %632 = vmatprep.subr.mxu0 0.0
        %633 = vmatpush1.msra.mxu0 0.0
        %634 = vmatprep.subr.mxu0 0.0
        %635 = vmatpush1.msra.mxu0 0.0
        %636 = vmatprep.subr.mxu0 0.0
        %637 = vmatpush1.msra.mxu0 0.0
        %638 = vmatprep.subr.mxu0 0.0
        %639 = vmatpush1.msra.mxu0 0.0
        %640 = vmatprep.subr.mxu0 0.0
        %641 = vmatpush1.msra.mxu0 0.0
        %642 = vmatprep.subr.mxu0 0.0
        %643 = vmatpush1.msra.mxu0 0.0
        %644 = vmatprep.subr.mxu0 0.0
        %645 = vmatpush1.msra.mxu0 0.0
        %646 = vmatprep.subr.mxu0 0.0
        %647 = vmatpush1.msra.mxu0 0.0
        %648 = vmatprep.subr.mxu0 0.0
        %649 = vmatpush1.msra.mxu0 0.0
        %650 = vmatprep.subr.mxu0 0.0
        %651 = vmatpush1.msra.mxu0 0.0
        %652 = vmatprep.subr.mxu0 0.0
        %653 = vmatpush1.msra.mxu0 0.0
        %654 = vmatprep.subr.mxu0 0.0
        %655 = vmatpush1.msra.mxu0 0.0
        %656 = vmatprep.subr.mxu0 0.0
        %657 = vmatpush1.msra.mxu0 0.0
        %658 = vmatprep.subr.mxu0 0.0
        %659 = vmatpush1.msra.mxu0 0.0
        %660 = vmatprep.subr.mxu0 0.0
        %661 = vmatpush1.msra.mxu0 0.0
        %662 = vmatprep.subr.mxu0 0.0
        %663 = vmatpush1.msra.mxu0 0.0
        %664 = vmatprep.subr.mxu0 0.0
        %665 = vmatpush1.msra.mxu0 0.0
        %666 = vmatprep.subr.mxu0 0.0
        %667 = vmatpush1.msra.mxu0 0.0
        %668 = vmatprep.subr.mxu0 0.0
        %669 = vmatpush1.msra.mxu0 0.0
        %670 = vmatprep.subr.mxu0 0.0
        %671 = vmatpush1.msra.mxu0 0.0
        %672 = vmatprep.mubr.f32.mxu0 0.0
        %673 = vmatmul.mubr.f32.gmra.mrb[0].mxu0 %v606
        %v674 = vpop.f32.mrb[0].mxu0
        %v675 = vadd.f32 %v602, %v674
        %v676 = vpop.f32.mrb[0].mxu0
        %677 = vdwg.mxu0
        %v678 = vxor.u32 %v675, 2147483648
        %v679 = vmul.f32 %v678, 1.442695
        %v680 = vpow.pop %v679
        %v681 = vadd.f32 %v680, 1.0
        %v682 = vrcp.pop %v681
        %v683 = vmul.f32 1.0, %v682
        %v684 = vld [vmem:[%s5] sm:$0xf]
        %v685 = vld [vmem:[%s6] sm:$0xf]
        %687 = vset.pattern.permute.xlu0 0
        %688 = vperm.xlu0 %687, %v685
        %v689 = vpop.permute.xlu0 %688
        %v692 = vsel %vm604, %v684, 0
        %694 = vmatprep.subr.mxu0 0.0
        %695 = vmatpush1.msra.mxu0 %v596
        %696 = vmatprep.subr.mxu0 0.0
        %697 = vmatpush1.msra.mxu0 0.0
        %698 = vmatprep.subr.mxu0 0.0
        %699 = vmatpush1.msra.mxu0 0.0
        %700 = vmatprep.subr.mxu0 0.0
        %701 = vmatpush1.msra.mxu0 0.0
        %702 = vmatprep.subr.mxu0 0.0
        %703 = vmatpush1.msra.mxu0 0.0
        %704 = vmatprep.subr.mxu0 0.0
        %705 = vmatpush1.msra.mxu0 0.0
        %706 = vmatprep.subr.mxu0 0.0
        %707 = vmatpush1.msra.mxu0 0.0
        %708 = vmatprep.subr.mxu0 0.0
        %709 = vmatpush1.msra.mxu0 0.0
        %710 = vmatprep.subr.mxu0 0.0
        %711 = vmatpush1.msra.mxu0 0.0
        %712 = vmatprep.subr.mxu0 0.0
        %713 = vmatpush1.msra.mxu0 0.0
        %714 = vmatprep.subr.mxu0 0.0
        %715 = vmatpush1.msra.mxu0 0.0
        %716 = vmatprep.subr.mxu0 0.0
        %717 = vmatpush1.msra.mxu0 0.0
        %718 = vmatprep.subr.mxu0 0.0
        %719 = vmatpush1.msra.mxu0 0.0
        %720 = vmatprep.subr.mxu0 0.0
        %721 = vmatpush1.msra.mxu0 0.0
        %722 = vmatprep.subr.mxu0 0.0
        %723 = vmatpush1.msra.mxu0 0.0
        %724 = vmatprep.subr.mxu0 0.0
        %725 = vmatpush1.msra.mxu0 0.0
        %726 = vmatprep.subr.mxu0 0.0
        %727 = vmatpush1.msra.mxu0 0.0
        %728 = vmatprep.subr.mxu0 0.0
        %729 = vmatpush1.msra.mxu0 0.0
        %730 = vmatprep.subr.mxu0 0.0
        %731 = vmatpush1.msra.mxu0 0.0
        %732 = vmatprep.subr.mxu0 0.0
        %733 = vmatpush1.msra.mxu0 0.0
        %734 = vmatprep.subr.mxu0 0.0
        %735 = vmatpush1.msra.mxu0 0.0
        %736 = vmatprep.subr.mxu0 0.0
        %737 = vmatpush1.msra.mxu0 0.0
        %738 = vmatprep.subr.mxu0 0.0
        %739 = vmatpush1.msra.mxu0 0.0
        %740 = vmatprep.subr.mxu0 0.0
        %741 = vmatpush1.msra.mxu0 0.0
        %742 = vmatprep.subr.mxu0 0.0
        %743 = vmatpush1.msra.mxu0 0.0
        %744 = vmatprep.subr.mxu0 0.0
        %745 = vmatpush1.msra.mxu0 0.0
        %746 = vmatprep.subr.mxu0 0.0
        %747 = vmatpush1.msra.mxu0 0.0
        %748 = vmatprep.subr.mxu0 0.0
        %749 = vmatpush1.msra.mxu0 0.0
        %750 = vmatprep.subr.mxu0 0.0
        %751 = vmatpush1.msra.mxu0 0.0
        %752 = vmatprep.subr.mxu0 0.0
        %753 = vmatpush1.msra.mxu0 0.0
        %754 = vmatprep.subr.mxu0 0.0
        %755 = vmatpush1.msra.mxu0 0.0
        %756 = vmatprep.subr.mxu0 0.0
        %757 = vmatpush1.msra.mxu0 0.0
        %758 = vmatprep.mubr.f32.mxu0 0.0
        %759 = vmatmul.mubr.f32.gmra.mrb[0].mxu0 %v692
        %v760 = vpop.f32.mrb[0].mxu0
        %v761 = vadd.f32 %v689, %v760
        %v762 = vpop.f32.mrb[0].mxu0
        %763 = vdwg.mxu0
        %v764 = vxor.u32 %v761, 2147483648
        %v765 = vmul.f32 %v764, 1.442695
        %v766 = vpow.pop %v765
        %v767 = vadd.f32 %v766, 1.0
        %v768 = vrcp.pop %v767
        %v769 = vmul.f32 1.0, %v768
        %v770 = vlaneseq
        %v771 = vshrl.u32 %v770, 7
        %v772 = vsub.s32 0, %v771
        %v773 = vrot.slane %v683, %v772
        %775 = vbcast.lane.b32.xlu0 %v773, 256
        %v776 = vpop.permute.xlu0 %775
        %s778 = sor.u32 256, 8
        %779 = vbcast.lane.b32.xlu0 %v773, %s778
        %v780 = vpop.permute.xlu0 %779
        %v781 = vlaneseq
        %v782 = vshrl.u32 %v781, 7
        %v783 = vsub.s32 1, %v782
        %v784 = vrot.slane %v683, %v783
        %786 = vbcast.lane.b32.xlu0 %v784, 256
        %v787 = vpop.permute.xlu0 %786
        %s789 = sor.u32 256, 8
        %790 = vbcast.lane.b32.xlu0 %v784, %s789
        %v791 = vpop.permute.xlu0 %790
        %v792 = vlaneseq
        %v793 = vshrl.u32 %v792, 7
        %v794 = vsub.s32 2, %v793
        %v795 = vrot.slane %v683, %v794
        %797 = vbcast.lane.b32.xlu0 %v795, 256
        %v798 = vpop.permute.xlu0 %797
        %s800 = sor.u32 256, 8
        %801 = vbcast.lane.b32.xlu0 %v795, %s800
        %v802 = vpop.permute.xlu0 %801
        %v803 = vlaneseq
        %v804 = vshrl.u32 %v803, 7
        %v805 = vsub.s32 3, %v804
        %v806 = vrot.slane %v683, %v805
        %808 = vbcast.lane.b32.xlu0 %v806, 256
        %v809 = vpop.permute.xlu0 %808
        %s811 = sor.u32 256, 8
        %812 = vbcast.lane.b32.xlu0 %v806, %s811
        %v813 = vpop.permute.xlu0 %812
        %v814 = vmul.f32 %v297, %v776
        %v815 = vmul.f32 %v298, %v780
        %v816 = vmul.f32 %v299, %v787
        %v817 = vmul.f32 %v300, %v791
        %v818 = vmul.f32 %v301, %v798
        %v819 = vmul.f32 %v302, %v802
        %v820 = vmul.f32 %v303, %v809
        %v821 = vmul.f32 %v304, %v813
        %v824 = vunpack.c.l.s4 1966171168
        %v825 = vunpack.c.0.s8 %v824
        %v826 = vlaneseq
        %v827 = vshrl.u32 %v826, 7
        %v828 = vsub.s32 %v825, %v827
        %v829 = vrot.slane %v769, %v828
        %v830 = vcombine.high %v829, %v829
        %v832 = vunpack.c.l.s4 1966171168
        %v833 = vunpack.c.0.s8 %v832
        %v834 = vlaneseq
        %v835 = vshrl.u32 %v834, 7
        %v836 = vsub.s32 %v833, %v835
        %v837 = vrot.slane %v829, %v836
        %v839 = vunpack.c.l.s4 1966171168
        %v840 = vunpack.c.0.s8 %v839
        %v841 = vlaneseq
        %v842 = vshrl.u32 %v841, 7
        %v843 = vsub.s32 %v840, %v842
        %v844 = vrot.slane %v830, %v843
        %v845 = vcombine.high %v837, %v837
        %v846 = vcombine.high %v844, %v844
        %v847 = vlaneseq
        %v848 = vshrl.u32 %v847, 7
        %v849 = vsub.s32 0, %v848
        %v850 = vrot.slane %v837, %v849
        %v851 = vlaneseq
        %v852 = vshrl.u32 %v851, 7
        %v853 = vsub.s32 0, %v852
        %v854 = vrot.slane %v844, %v853
        %v855 = vlaneseq
        %v856 = vshrl.u32 %v855, 7
        %v857 = vsub.s32 0, %v856
        %v858 = vrot.slane %v845, %v857
        %v859 = vlaneseq
        %v860 = vshrl.u32 %v859, 7
        %v861 = vsub.s32 0, %v860
        %v862 = vrot.slane %v846, %v861
        %v867 = vmul.f32 %v814, %v850
        %v868 = vmul.f32 %v815, %v850
        %v869 = vmul.f32 %v816, %v854
        %v870 = vmul.f32 %v817, %v854
        %v871 = vmul.f32 %v818, %v858
        %v872 = vmul.f32 %v819, %v858
        %v873 = vmul.f32 %v820, %v862
        %v874 = vmul.f32 %v821, %v862
        %875 = vst.msk [vmem:[%s296] sm:$0xff] %vm305, %v867
        %876 = vst.msk [vmem:[%s296 + $0x8] sm:$0xff] %vm305, %v868
        %877 = vst.msk [vmem:[%s296 + $0x10] sm:$0xff] %vm305, %v869
        %878 = vst.msk [vmem:[%s296 + $0x18] sm:$0xff] %vm305, %v870
        %879 = vst.msk [vmem:[%s296 + $0x20] sm:$0xff] %vm305, %v871
        %880 = vst.msk [vmem:[%s296 + $0x28] sm:$0xff] %vm305, %v872
        %881 = vst.msk [vmem:[%s296 + $0x30] sm:$0xff] %vm305, %v873
        %882 = vst.msk [vmem:[%s296 + $0x38] sm:$0xff] %vm305, %v874
        %s883 = sand.u32 %s184, 1
        %s884 = scalar_lea.sflag [#allocation4], %s883
        %s885 = sand.u32 %s184, 1
        %s886 = smul.addr %s885, 64
        %s887 = scalar_lea.vmem [#allocation5], %s886
        // Predicated region
        $region53: #{tpu_custom_call.1} parent=47 // pred_check
          %p888 = pneg %p194
        $region54: #{tpu_custom_call.1} parent=47 // pred_check_branch
          %890 = sbr.rel (%p888) target = $region56
        $region55: #{tpu_custom_call.1} parent=47 // pred_region
          %s892 = ssub.s32 1024, 1024
          %893 = vsyncadd %s884, %s892
          %s894 = smul.addr %s24, 8
          %s895 = smul.addr %s894, 128
          %s896 = scalar_lea.hbm %s7, %s895
          %s897 = sshll.u32 %s887, 4
          %s898 = int_to_ptr.vmem [resolvable:$true] %s897
          %903 = dma.vmem_to_hbm [thread:$0]  %s898, 1024, %s896, %s884, 128, 128, 8
        $region56: #{tpu_custom_call.1} parent=47 // pred_fallthru
          _
      $region48: #{tpu_custom_call.1} parent=5 // pred_fallthru
        _
      %p904 = scmp.le.s32.totalorder 2, %s19
      // Predicated region
      $region57: #{tpu_custom_call.1} parent=5 // pred_check
        %p905 = pneg %p904
      $region58: #{tpu_custom_call.1} parent=5 // pred_check_branch
        %907 = sbr.rel (%p905) target = $region60
      $region59: #{tpu_custom_call.1} parent=5 // pred_region
        %s908 = ssub.s32 %s19, 2
        // Predicated region
        $region61: #{tpu_custom_call.1} parent=59 // pred_check
          %p909 = pneg %p200
        $region62: #{tpu_custom_call.1} parent=59 // pred_check_branch
          %911 = sbr.rel (%p909) target = $region64
        $region63: #{tpu_custom_call.1} parent=59 // pred_region
          %s912 = sand.u32 %s185, 1
          %s913 = scalar_lea.sflag [#allocation4], %s912
          %s914 = sand.u32 %s185, 1
          %s915 = smul.addr %s914, 64
          %s916 = scalar_lea.vmem [#allocation5], %s915
          %917 = dma.done %s913, 1024
        $region64: #{tpu_custom_call.1} parent=59 // pred_fallthru
          _
      $region60: #{tpu_custom_call.1} parent=5 // pred_fallthru
        _
    $region6: #{tpu_custom_call.1} parent=1 // loop_footer
      %s23 = sadd.s32 1, %s19
    $region7: #{tpu_custom_call.1} parent=1 // loop_footer_branch
      %18 = sbr.rel target = $region3
    $region8: #{tpu_custom_call.1} parent=1 // loop_exit
      _
    %918 = vsyncpa [#allocation3], 1
    %s919 = scalar_lea.sflag [#allocation3], 1
    %920 = vsyncpa %s919, 1
    %921 = vsyncpa [#allocation4], 1
    %s922 = scalar_lea.sflag [#allocation4], 1
    %923 = vsyncpa %s922, 1

</llo_original>
